<compile_context>
chip_gen: v6e
topology: v6e:2x2x1
jax: 0.10.0
libtpu: 0.0.40
codegen_flags: <defaults>
</compile_context>

<pallas_src>
import functools

import jax
import jax.numpy as jnp
from jax import lax
from jax.experimental import pallas as pl
from jax.experimental.pallas import tpu as pltpu


def _round_up(x, m):
    return (x + m - 1) // m * m


def _bert_lm_head_kernel(x_ref, w1_ref, b1_ref, gamma_ref, beta_ref,
                         w2_ref, b2_ref, out_ref, h_scratch, *, eps):
    """Grid = (row tiles, vocab tiles); vocab axis is innermost & serial.

    At vocab tile 0 the (dense -> gelu -> layernorm) transform for this row
    tile is computed into VMEM scratch (in the decoder-weight dtype); every
    vocab tile then runs the decoder matmul against its (H, tv) weight slab
    and adds the bias slice.
    """
    @pl.when(pl.program_id(1) == 0)
    def _():
        # Dense: native-dtype MXU matmul, f32 accumulation.
        h = jnp.dot(x_ref[...], w1_ref[...], preferred_element_type=jnp.float32)
        h = h + b1_ref[...].astype(jnp.float32)          # (tm,H) + (1,H)
        # Exact gelu: 0.5 * x * (1 + erf(x / sqrt(2)))
        h = 0.5 * h * (1.0 + lax.erf(h * jnp.float32(0.7071067811865476)))
        # LayerNorm over hidden axis (f32 math).
        mean = jnp.mean(h, axis=-1, keepdims=True)
        var = jnp.mean((h - mean) ** 2, axis=-1, keepdims=True)
        h = (h - mean) * lax.rsqrt(var + jnp.float32(eps))
        h = h * gamma_ref[...].astype(jnp.float32) + beta_ref[...].astype(jnp.float32)
        h_scratch[...] = h.astype(h_scratch.dtype)

    # Decoder: native-dtype MXU matmul, f32 accumulation.
    logits = jnp.dot(h_scratch[...], w2_ref[...], preferred_element_type=jnp.float32)
    logits = logits + b2_ref[...].astype(jnp.float32)    # (tm,tv) + (1,tv)
    out_ref[...] = logits.astype(out_ref.dtype)


def bert_lm_prediction_head(hidden_states, params, *, eps=1e-12, tm=256, tv=512):
    """hidden_states: (B, S, H) -> logits: (B, S, V)."""
    B, S, H = hidden_states.shape
    M = B * S
    x = hidden_states.reshape(M, H)

    w1 = params["dense_w"]        # (H, H)  (already in x @ W layout)
    b1 = params["dense_b"]        # (1, H)
    gamma = params["ln_gamma"]    # (1, H)
    beta = params["ln_beta"]      # (1, H)
    w2 = params["decoder_w"]      # (H, V)
    b2 = params["decoder_b"]      # (1, V)
    V = w2.shape[1]

    # Tile sizes, clipped to the (padded) problem size.
    tm = min(tm, _round_up(M, 8))
    tv = min(tv, _round_up(V, 128))
    M_pad = _round_up(M, tm)
    V_pad = _round_up(V, tv)

    # Zero-pad rows / vocab to tile multiples; padded logits are sliced off.
    if M_pad != M:
        x = jnp.pad(x, ((0, M_pad - M), (0, 0)))
    if V_pad != V:
        w2 = jnp.pad(w2, ((0, 0), (0, V_pad - V)))
        b2 = jnp.pad(b2, ((0, 0), (0, V_pad - V)))

    # Decoder matmul runs in the weights' native dtype (bf16 weights -> bf16 MXU).
    compute_dtype = w2.dtype

    kernel = functools.partial(_bert_lm_head_kernel, eps=eps)

    out = pl.pallas_call(
        kernel,
        out_shape=jax.ShapeDtypeStruct((M_pad, V_pad), hidden_states.dtype),
        grid_spec=pltpu.PrefetchScalarGridSpec(
            num_scalar_prefetch=0,
            grid=(M_pad // tm, V_pad // tv),
            in_specs=[
                pl.BlockSpec((tm, H), lambda i, j: (i, 0)),    # x row tile
                pl.BlockSpec((H, H), lambda i, j: (0, 0)),     # dense weight
                pl.BlockSpec((1, H), lambda i, j: (0, 0)),     # dense bias
                pl.BlockSpec((1, H), lambda i, j: (0, 0)),     # LN gamma
                pl.BlockSpec((1, H), lambda i, j: (0, 0)),     # LN beta
                pl.BlockSpec((H, tv), lambda i, j: (0, j)),    # decoder weight tile
                pl.BlockSpec((1, tv), lambda i, j: (0, j)),    # decoder bias tile
            ],
            out_specs=pl.BlockSpec((tm, tv), lambda i, j: (i, j)),
            scratch_shapes=[pltpu.VMEM((tm, H), compute_dtype)],
        ),
        compiler_params=pltpu.CompilerParams(
            # Row axis is parallel (shards across v7x's 2 TensorCores); vocab
            # axis carries the h_scratch dependency and must stay serial.
            dimension_semantics=("parallel", "arbitrary")),
    )(x, w1, b1, gamma, beta, w2, b2)

    return out[:M, :V].reshape(B, S, V)


def _reference(hidden_states, params, eps=1e-12):
    x = hidden_states.astype(jnp.float32)
    h = x @ params["dense_w"].astype(jnp.float32) + params["dense_b"].astype(jnp.float32)
    h = 0.5 * h * (1.0 + lax.erf(h / jnp.sqrt(2.0)))
    mean = jnp.mean(h, axis=-1, keepdims=True)
    var = jnp.mean((h - mean) ** 2, axis=-1, keepdims=True)
    h = (h - mean) / jnp.sqrt(var + eps)
    h = h * params["ln_gamma"].astype(jnp.float32) + params["ln_beta"].astype(jnp.float32)
    return h @ params["decoder_w"].astype(jnp.float32) + params["decoder_b"].astype(jnp.float32)


if __name__ == "__main__":
    # Small config: batch=2, seq=8, hidden=32, vocab=500 (non-multiple of 128
    # to exercise the vocab-padding path, like BERT's 30522).
    B, S, H, V = 2, 8, 32, 500

    key = jax.random.PRNGKey(0)
    k_x, k_w1, k_b1, k_g, k_bt, k_w2 = jax.random.split(key, 6)

    hidden_states = jax.random.normal(k_x, (B, S, H), dtype=jnp.float32)

    params = {
        # nn.Linear(H, H): stored here directly as (in, out) so y = x @ W + b
        "dense_w": 0.02 * jax.random.normal(k_w1, (H, H), dtype=jnp.float32),
        "dense_b": 0.01 * jax.random.normal(k_b1, (1, H), dtype=jnp.float32),
        # BertLayerNorm(H)
        "ln_gamma": 1.0 + 0.01 * jax.random.normal(k_g, (1, H), dtype=jnp.float32),
        "ln_beta": 0.01 * jax.random.normal(k_bt, (1, H), dtype=jnp.float32),
        # nn.Linear(H, V, bias=False) + separate zero-initialized bias param
        "decoder_w": 0.02 * jax.random.normal(k_w2, (H, V), dtype=jnp.float32),
        "decoder_b": jnp.zeros((1, V), dtype=jnp.float32),
    }

    logits = bert_lm_prediction_head(hidden_states, params)
    logits = jax.block_until_ready(logits)

    ref = _reference(hidden_states, params).reshape(B, S, V)
    assert logits.shape == (B, S, V)
    assert jnp.allclose(logits, ref, atol=1e-4, rtol=1e-4)

    print("KERNEL_OK")
</pallas_src>

<mosaic_0001>
module attributes {stable_mosaic.version = 11 : i64} {
  func.func @_bert_lm_head_kernel(%arg0: i32, %arg1: i32, %arg2: memref<16x32xf32, #tpu.memory_space<vmem>>, %arg3: memref<32x32xf32, #tpu.memory_space<vmem>>, %arg4: memref<1x32xf32, #tpu.memory_space<vmem>>, %arg5: memref<1x32xf32, #tpu.memory_space<vmem>>, %arg6: memref<1x32xf32, #tpu.memory_space<vmem>>, %arg7: memref<32x512xf32, #tpu.memory_space<vmem>>, %arg8: memref<1x512xf32, #tpu.memory_space<vmem>>, %arg9: memref<16x512xf32, #tpu.memory_space<vmem>>, %arg10: memref<16x32xf32, #tpu.memory_space<vmem>>) attributes {dimension_semantics = [#tpu.dimension_semantics<parallel>, #tpu.dimension_semantics<arbitrary>], iteration_bounds = array<i64: 1, 1>, scalar_prefetch = 0 : i64, scratch_operands = 1 : i64, tpu.core_type = #tpu.core_type<tc>, window_params = [{transform_indices = @transform_0, window_bounds = array<i64: 16, 32>}, {pipeline_mode = #tpu.pipeline_mode<synchronous>, transform_indices = @transform_1, window_bounds = array<i64: 32, 32>}, {pipeline_mode = #tpu.pipeline_mode<synchronous>, transform_indices = @transform_2, window_bounds = array<i64: 1, 32>}, {pipeline_mode = #tpu.pipeline_mode<synchronous>, transform_indices = @transform_3, window_bounds = array<i64: 1, 32>}, {pipeline_mode = #tpu.pipeline_mode<synchronous>, transform_indices = @transform_4, window_bounds = array<i64: 1, 32>}, {transform_indices = @transform_5, window_bounds = array<i64: 32, 512>}, {transform_indices = @transform_6, window_bounds = array<i64: 1, 512>}, {transform_indices = @transform_7, window_bounds = array<i64: 16, 512>}]} {
    %c0_i32 = arith.constant 0 : i32
    %0 = arith.cmpi eq, %arg1, %c0_i32 : i32
    %1 = arith.extui %0 : i1 to i32
    %c0_i32_0 = arith.constant 0 : i32
    %2 = arith.cmpi ne, %1, %c0_i32_0 : i32
    scf.if %2 {
      %c0_8 = arith.constant 0 : index
      %c0_9 = arith.constant 0 : index
      %10 = vector.load %arg2[%c0_8, %c0_9] : memref<16x32xf32, #tpu.memory_space<vmem>>, vector<16x32xf32>
      %c0_10 = arith.constant 0 : index
      %c0_11 = arith.constant 0 : index
      %11 = vector.load %arg3[%c0_10, %c0_11] : memref<32x32xf32, #tpu.memory_space<vmem>>, vector<32x32xf32>
      %cst_12 = arith.constant dense<0.000000e+00> : vector<16x32xf32>
      %12 = tpu.matmul %10, %11, %cst_12 {dimension_numbers = #tpu.dot_dimension_numbers<[1], [0], [0], [1], [0, 0, 1, 1], [], []>} : vector<16x32xf32>, vector<32x32xf32>, vector<16x32xf32> -> vector<16x32xf32>
      %c0_13 = arith.constant 0 : index
      %c0_14 = arith.constant 0 : index
      %13 = vector.load %arg4[%c0_13, %c0_14] : memref<1x32xf32, #tpu.memory_space<vmem>>, vector<1x32xf32>
      %14 = vector.broadcast %13 : vector<1x32xf32> to vector<16x32xf32>
      %15 = arith.addf %12, %14 : vector<16x32xf32>
      %cst_15 = arith.constant 5.000000e-01 : f32
      %16 = vector.broadcast %cst_15 : f32 to vector<16x32xf32>
      %17 = arith.mulf %16, %15 : vector<16x32xf32>
      %cst_16 = arith.constant 0.707106769 : f32
      %18 = vector.broadcast %cst_16 : f32 to vector<16x32xf32>
      %19 = arith.mulf %15, %18 : vector<16x32xf32>
      %20 = math.erf %19 : vector<16x32xf32>
      %cst_17 = arith.constant 1.000000e+00 : f32
      %21 = vector.broadcast %cst_17 : f32 to vector<16x32xf32>
      %22 = arith.addf %21, %20 : vector<16x32xf32>
      %23 = arith.mulf %17, %22 : vector<16x32xf32>
      %cst_18 = arith.constant dense<0.000000e+00> : vector<16xf32>
      %24 = vector.multi_reduction <add>, %23, %cst_18 [1] : vector<16x32xf32> to vector<16xf32>
      %25 = vector.shape_cast %24 : vector<16xf32> to vector<16x1xf32>
      %cst_19 = arith.constant 3.200000e+01 : f32
      %26 = vector.broadcast %cst_19 : f32 to vector<16x1xf32>
      %27 = arith.divf %25, %26 : vector<16x1xf32>
      %28 = vector.broadcast %27 : vector<16x1xf32> to vector<16x32xf32>
      %29 = arith.subf %23, %28 : vector<16x32xf32>
      %30 = arith.mulf %29, %29 : vector<16x32xf32>
      %cst_20 = arith.constant dense<0.000000e+00> : vector<16xf32>
      %31 = vector.multi_reduction <add>, %30, %cst_20 [1] : vector<16x32xf32> to vector<16xf32>
      %32 = vector.shape_cast %31 : vector<16xf32> to vector<16x1xf32>
      %cst_21 = arith.constant 3.200000e+01 : f32
      %33 = vector.broadcast %cst_21 : f32 to vector<16x1xf32>
      %34 = arith.divf %32, %33 : vector<16x1xf32>
      %35 = vector.broadcast %27 : vector<16x1xf32> to vector<16x32xf32>
      %36 = arith.subf %23, %35 : vector<16x32xf32>
      %cst_22 = arith.constant 9.99999996E-13 : f32
      %37 = vector.broadcast %cst_22 : f32 to vector<16x1xf32>
      %38 = arith.addf %34, %37 : vector<16x1xf32>
      %39 = math.rsqrt %38 : vector<16x1xf32>
      %40 = vector.broadcast %39 : vector<16x1xf32> to vector<16x32xf32>
      %41 = arith.mulf %36, %40 : vector<16x32xf32>
      %c0_23 = arith.constant 0 : index
      %c0_24 = arith.constant 0 : index
      %42 = vector.load %arg5[%c0_23, %c0_24] : memref<1x32xf32, #tpu.memory_space<vmem>>, vector<1x32xf32>
      %43 = vector.broadcast %42 : vector<1x32xf32> to vector<16x32xf32>
      %44 = arith.mulf %41, %43 : vector<16x32xf32>
      %c0_25 = arith.constant 0 : index
      %c0_26 = arith.constant 0 : index
      %45 = vector.load %arg6[%c0_25, %c0_26] : memref<1x32xf32, #tpu.memory_space<vmem>>, vector<1x32xf32>
      %46 = vector.broadcast %45 : vector<1x32xf32> to vector<16x32xf32>
      %47 = arith.addf %44, %46 : vector<16x32xf32>
      %c0_27 = arith.constant 0 : index
      %c0_28 = arith.constant 0 : index
      %48 = vector.load %arg10[%c0_27, %c0_28] : memref<16x32xf32, #tpu.memory_space<vmem>>, vector<16x32xf32>
      tpu.vector_store %arg10[%c0_27, %c0_28], %47 {strides = array<i32>} : memref<16x32xf32, #tpu.memory_space<vmem>>, vector<16x32xf32>,
    } else {
    }
    %c0 = arith.constant 0 : index
    %c0_1 = arith.constant 0 : index
    %3 = vector.load %arg10[%c0, %c0_1] : memref<16x32xf32, #tpu.memory_space<vmem>>, vector<16x32xf32>
    %c0_2 = arith.constant 0 : index
    %c0_3 = arith.constant 0 : index
    %4 = vector.load %arg7[%c0_2, %c0_3] : memref<32x512xf32, #tpu.memory_space<vmem>>, vector<32x512xf32>
    %cst = arith.constant dense<0.000000e+00> : vector<16x512xf32>
    %5 = tpu.matmul %3, %4, %cst {dimension_numbers = #tpu.dot_dimension_numbers<[1], [0], [0], [1], [0, 0, 1, 1], [], []>} : vector<16x32xf32>, vector<32x512xf32>, vector<16x512xf32> -> vector<16x512xf32>
    %c0_4 = arith.constant 0 : index
    %c0_5 = arith.constant 0 : index
    %6 = vector.load %arg8[%c0_4, %c0_5] : memref<1x512xf32, #tpu.memory_space<vmem>>, vector<1x512xf32>
    %7 = vector.broadcast %6 : vector<1x512xf32> to vector<16x512xf32>
    %8 = arith.addf %5, %7 : vector<16x512xf32>
    %c0_6 = arith.constant 0 : index
    %c0_7 = arith.constant 0 : index
    %9 = vector.load %arg9[%c0_6, %c0_7] : memref<16x512xf32, #tpu.memory_space<vmem>>, vector<16x512xf32>
    tpu.vector_store %arg9[%c0_6, %c0_7], %8 {strides = array<i32>} : memref<16x512xf32, #tpu.memory_space<vmem>>, vector<16x512xf32>,
    return
  }
  func.func @transform_0(%arg0: i32, %arg1: i32) -> (i32, i32) {
    %c0_i32 = arith.constant 0 : i32
    %c0_i32_0 = arith.constant 0 : i32
    return %arg0, %c0_i32 : i32, i32
  }
  func.func @transform_1(%arg0: i32, %arg1: i32) -> (i32, i32) {
    %c0_i32 = arith.constant 0 : i32
    %c0_i32_0 = arith.constant 0 : i32
    %c0_i32_1 = arith.constant 0 : i32
    return %c0_i32, %c0_i32_0 : i32, i32
  }
  func.func @transform_2(%arg0: i32, %arg1: i32) -> (i32, i32) {
    %c0_i32 = arith.constant 0 : i32
    %c0_i32_0 = arith.constant 0 : i32
    %c0_i32_1 = arith.constant 0 : i32
    return %c0_i32, %c0_i32_0 : i32, i32
  }
  func.func @transform_3(%arg0: i32, %arg1: i32) -> (i32, i32) {
    %c0_i32 = arith.constant 0 : i32
    %c0_i32_0 = arith.constant 0 : i32
    %c0_i32_1 = arith.constant 0 : i32
    return %c0_i32, %c0_i32_0 : i32, i32
  }
  func.func @transform_4(%arg0: i32, %arg1: i32) -> (i32, i32) {
    %c0_i32 = arith.constant 0 : i32
    %c0_i32_0 = arith.constant 0 : i32
    %c0_i32_1 = arith.constant 0 : i32
    return %c0_i32, %c0_i32_0 : i32, i32
  }
  func.func @transform_5(%arg0: i32, %arg1: i32) -> (i32, i32) {
    %c0_i32 = arith.constant 0 : i32
    %c0_i32_0 = arith.constant 0 : i32
    return %c0_i32, %arg1 : i32, i32
  }
  func.func @transform_6(%arg0: i32, %arg1: i32) -> (i32, i32) {
    %c0_i32 = arith.constant 0 : i32
    %c0_i32_0 = arith.constant 0 : i32
    return %c0_i32, %arg1 : i32, i32
  }
  func.func @transform_7(%arg0: i32, %arg1: i32) -> (i32, i32) {
    %c0_i32 = arith.constant 0 : i32
    return %arg0, %arg1 : i32, i32
  }
}

</mosaic_0001>

<llo_original>
// kernel: tpu_custom_call.1
$region0: #{tpu_custom_call.1}
  #allocation0 [shape = 'u32[]', space=smem, size = 0x4, offset = 0x4, fixed_abs, tag = 'smem constant byte address 0x4 - core index']
  #allocation1 [shape = 'u32[144,128]{1,0:T(1,128)}', space=vmem, size = 0x12000, scoped, tag = 'internal scratch']
  #allocation2 [shape = 'f32[16,32]{1,0:T(8,128)}', space=vmem, size = 0x2000, scoped, tag = 'scratch operand']
  %s0 = inlined_call_operand.hbm [shape: f32[16,32], index: 0, kind: input, shape index: {}]
  %s1 = inlined_call_operand.hbm [shape: f32[32,32], index: 1, kind: input, shape index: {}]
  %s2 = inlined_call_operand.vmem [shape: f32[1,32], index: 2, kind: input, shape index: {}]
  %s3 = inlined_call_operand.vmem [shape: f32[1,32], index: 3, kind: input, shape index: {}]
  %s4 = inlined_call_operand.vmem [shape: f32[1,32], index: 4, kind: input, shape index: {}]
  %s5 = inlined_call_operand.hbm [shape: f32[32,512], index: 5, kind: input, shape index: {}]
  %s6 = inlined_call_operand.vmem [shape: f32[1,512], index: 6, kind: input, shape index: {}]
  %s7 = inlined_call_operand.hbm [shape: f32[16,512], index: 7, kind: output, shape index: {}]
  %s8 = sld [smem:[#allocation0]]
  $region54: #{tpu_custom_call.1} parent=0
    _
  %s10 = ssub.s32 1, %s8
  %s11 = scalar_select 0, %s10, %s8
  $region1: #{tpu_custom_call.1} parent=0
    #allocation3 [shape = 'u8[8192]{0}', space=vmem, size = 0x2000, scoped, tag = 'input window, operand 0, single buffered']
    #allocation4 [shape = 's32[1]{0}', space=sflag, size = 0x4, scoped, tag = 'scoped memory for tpu_custom_call.1']
    #allocation5 [shape = 's32[1]{0}', space=sflag, size = 0x4, scoped, tag = 'scoped memory for tpu_custom_call.1']
    #allocation6 [shape = 'u8[16384]{0}', space=vmem, size = 0x4000, scoped, tag = 'input window, operand 1, single buffered']
    #allocation7 [shape = 's32[1]{0}', space=sflag, size = 0x4, scoped, tag = 'scoped memory for tpu_custom_call.1']
    #allocation8 [shape = 'u8[65536]{0}', space=vmem, size = 0x10000, scoped, tag = 'input window, operand 5, single buffered']
    #allocation9 [shape = 'u8[32768]{0}', space=vmem, size = 0x8000, scoped, tag = 'output window, operand 0, single buffered']
    %12 = vsyncpa [#allocation4], 0
    %13 = vsyncpa [#allocation7], 0
    %14 = vsyncpa [#allocation5], 0
    // Predicated region
    $region2: #{tpu_custom_call.1} parent=1 // pred_check
      _
    $region3: #{tpu_custom_call.1} parent=1 // pred_check_branch
      %16 = sbr.rel (0) target = $region5
    $region4: #{tpu_custom_call.1} parent=1 // pred_region
      %s18 = ssub.s32 256, 256
      %19 = vsyncadd [#allocation4], %s18
      %s20 = sshll.u32 [#allocation3], 4
      %s21 = int_to_ptr.vmem [resolvable:$true] %s20
      %26 = dma.hbm_to_vmem [thread:$0]  %s0, 256, %s21, [#allocation4], 128, 128, 8
    $region5: #{tpu_custom_call.1} parent=1 // pred_fallthru
      _
    // Predicated region
    $region6: #{tpu_custom_call.1} parent=1 // pred_check
      _
    $region7: #{tpu_custom_call.1} parent=1 // pred_check_branch
      %28 = sbr.rel (0) target = $region9
    $region8: #{tpu_custom_call.1} parent=1 // pred_region
      %s30 = ssub.s32 512, 512
      %31 = vsyncadd [#allocation7], %s30
      %s32 = sshll.u32 [#allocation6], 4
      %s33 = int_to_ptr.vmem [resolvable:$true] %s32
      %38 = dma.hbm_to_vmem [thread:$0]  %s1, 512, %s33, [#allocation7], 128, 128, 8
    $region9: #{tpu_custom_call.1} parent=1 // pred_fallthru
      _
    // Predicated region
    $region10: #{tpu_custom_call.1} parent=1 // pred_check
      _
    $region11: #{tpu_custom_call.1} parent=1 // pred_check_branch
      %40 = sbr.rel (0) target = $region13
    $region12: #{tpu_custom_call.1} parent=1 // pred_region
      _
    $region13: #{tpu_custom_call.1} parent=1 // pred_fallthru
      _
    // Predicated region
    $region14: #{tpu_custom_call.1} parent=1 // pred_check
      _
    $region15: #{tpu_custom_call.1} parent=1 // pred_check_branch
      %42 = sbr.rel (0) target = $region17
    $region16: #{tpu_custom_call.1} parent=1 // pred_region
      _
    $region17: #{tpu_custom_call.1} parent=1 // pred_fallthru
      _
    // Predicated region
    $region18: #{tpu_custom_call.1} parent=1 // pred_check
      _
    $region19: #{tpu_custom_call.1} parent=1 // pred_check_branch
      %44 = sbr.rel (0) target = $region21
    $region20: #{tpu_custom_call.1} parent=1 // pred_region
      _
    $region21: #{tpu_custom_call.1} parent=1 // pred_fallthru
      _
    // Predicated region
    $region22: #{tpu_custom_call.1} parent=1 // pred_check
      _
    $region23: #{tpu_custom_call.1} parent=1 // pred_check_branch
      %46 = sbr.rel (0) target = $region25
    $region24: #{tpu_custom_call.1} parent=1 // pred_region
      %s48 = ssub.s32 2048, 2048
      %49 = vsyncadd [#allocation7], %s48
      %s50 = sshll.u32 [#allocation8], 4
      %s51 = int_to_ptr.vmem [resolvable:$true] %s50
      %56 = dma.hbm_to_vmem [thread:$0]  %s5, 2048, %s51, [#allocation7], 512, 512, 32
    $region25: #{tpu_custom_call.1} parent=1 // pred_fallthru
      _
    // Predicated region
    $region26: #{tpu_custom_call.1} parent=1 // pred_check
      _
    $region27: #{tpu_custom_call.1} parent=1 // pred_check_branch
      %58 = sbr.rel (0) target = $region29
    $region28: #{tpu_custom_call.1} parent=1 // pred_region
      _
    $region29: #{tpu_custom_call.1} parent=1 // pred_fallthru
      _
    // Predicated region
    $region30: #{tpu_custom_call.1} parent=1 // pred_check
      _
    $region31: #{tpu_custom_call.1} parent=1 // pred_check_branch
      %60 = sbr.rel (0) target = $region33
    $region32: #{tpu_custom_call.1} parent=1 // pred_region
      %61 = dma.done [#allocation4], 256
    $region33: #{tpu_custom_call.1} parent=1 // pred_fallthru
      _
    // Predicated region
    $region34: #{tpu_custom_call.1} parent=1 // pred_check
      _
    $region35: #{tpu_custom_call.1} parent=1 // pred_check_branch
      %63 = sbr.rel (0) target = $region37
    $region36: #{tpu_custom_call.1} parent=1 // pred_region
      %64 = dma.done [#allocation7], 512
    $region37: #{tpu_custom_call.1} parent=1 // pred_fallthru
      _
    // Predicated region
    $region38: #{tpu_custom_call.1} parent=1 // pred_check
      _
    $region39: #{tpu_custom_call.1} parent=1 // pred_check_branch
      %66 = sbr.rel (0) target = $region41
    $region40: #{tpu_custom_call.1} parent=1 // pred_region
      %67 = dma.done [#allocation7], 2048
    $region41: #{tpu_custom_call.1} parent=1 // pred_fallthru
      _
    %p68 = scmp.eq.s32.totalorder 0, 0
    // Predicated region
    $region42: #{tpu_custom_call.1} parent=1 // pred_check
      %p69 = pneg %p68
    $region43: #{tpu_custom_call.1} parent=1 // pred_check_branch
      %71 = sbr.rel (%p69) target = $region45
    $region44: #{tpu_custom_call.1} parent=1 // pred_region
      %v72 = vld [vmem:[#allocation3] sm:$0xff]
      %v73 = vld [vmem:[#allocation3 + $0x8] sm:$0xff]
      %v74 = vld [vmem:[#allocation6] sm:$0xff]
      %v75 = vld [vmem:[#allocation6 + $0x8] sm:$0xff]
      %v76 = vld [vmem:[#allocation6 + $0x10] sm:$0xff]
      %v77 = vld [vmem:[#allocation6 + $0x18] sm:$0xff]
      %v78 = vld [vmem:[%s2] sm:$0x1]
      %v80 = vlaneseq
      %v81 = vshrl.u32 %v80, 7
      %v82 = vsub.s32 0, %v81
      %v83 = vrot.slane %v78, %v82
      %vm85 = vcmask 261120
      %v87 = vsel %vm85, %v72, 0
      %v90 = vsel %vm85, %v73, 0
      %92 = vmatprep.subr.mxu0 0.0
      %93 = vmatpush1.msra.mxu0 0.0
      %94 = vmatprep.subr.mxu0 0.0
      %95 = vmatpush1.msra.mxu0 0.0
      %96 = vmatprep.subr.mxu0 0.0
      %97 = vmatpush1.msra.mxu0 0.0
      %98 = vmatprep.subr.mxu0 0.0
      %99 = vmatpush1.msra.mxu0 0.0
      %100 = vmatprep.subr.mxu0 0.0
      %101 = vmatpush1.msra.mxu0 0.0
      %102 = vmatprep.subr.mxu0 0.0
      %103 = vmatpush1.msra.mxu0 0.0
      %104 = vmatprep.subr.mxu0 0.0
      %105 = vmatpush1.msra.mxu0 0.0
      %106 = vmatprep.subr.mxu0 0.0
      %107 = vmatpush1.msra.mxu0 0.0
      %108 = vmatprep.subr.mxu0 0.0
      %109 = vmatpush1.msra.mxu0 0.0
      %110 = vmatprep.subr.mxu0 0.0
      %111 = vmatpush1.msra.mxu0 0.0
      %112 = vmatprep.subr.mxu0 0.0
      %113 = vmatpush1.msra.mxu0 0.0
      %114 = vmatprep.subr.mxu0 0.0
      %115 = vmatpush1.msra.mxu0 0.0
      %116 = vmatprep.subr.mxu0 0.0
      %117 = vmatpush1.msra.mxu0 %v77
      %118 = vmatprep.subr.mxu0 0.0
      %119 = vmatpush1.msra.mxu0 %v76
      %120 = vmatprep.subr.mxu0 0.0
      %121 = vmatpush1.msra.mxu0 %v75
      %122 = vmatprep.subr.mxu0 0.0
      %123 = vmatpush1.msra.mxu0 %v74
      %124 = vmatprep.subr.mxu0 0.0
      %125 = vmatpush2.msra.mxu0 0.0
      %126 = vmatprep.subr.mxu0 0.0
      %127 = vmatpush2.msra.mxu0 0.0
      %128 = vmatprep.subr.mxu0 0.0
      %129 = vmatpush2.msra.mxu0 0.0
      %130 = vmatprep.subr.mxu0 0.0
      %131 = vmatpush2.msra.mxu0 0.0
      %132 = vmatprep.subr.mxu0 0.0
      %133 = vmatpush2.msra.mxu0 0.0
      %134 = vmatprep.subr.mxu0 0.0
      %135 = vmatpush2.msra.mxu0 0.0
      %136 = vmatprep.subr.mxu0 0.0
      %137 = vmatpush2.msra.mxu0 0.0
      %138 = vmatprep.subr.mxu0 0.0
      %139 = vmatpush2.msra.mxu0 0.0
      %140 = vmatprep.subr.mxu0 0.0
      %141 = vmatpush2.msra.mxu0 0.0
      %142 = vmatprep.subr.mxu0 0.0
      %143 = vmatpush2.msra.mxu0 0.0
      %144 = vmatprep.subr.mxu0 0.0
      %145 = vmatpush2.msra.mxu0 0.0
      %146 = vmatprep.subr.mxu0 0.0
      %147 = vmatpush2.msra.mxu0 0.0
      %148 = vmatprep.subr.mxu0 0.0
      %149 = vmatpush2.msra.mxu0 0.0
      %150 = vmatprep.subr.mxu0 0.0
      %151 = vmatpush2.msra.mxu0 0.0
      %152 = vmatprep.subr.mxu0 0.0
      %153 = vmatpush2.msra.mxu0 0.0
      %154 = vmatprep.subr.mxu0 0.0
      %155 = vmatpush2.msra.mxu0 0.0
      %156 = vmatprep.mubr.f32.mxu0 0.0
      %157 = vmatmul.mubr.f32.gmra.mxu0 %v87
      %v158 = vpop.f32.mrf.mxu0
      %v159 = vadd.f32 %v83, %v158
      %v160 = vpop.f32.mrf.mxu0
      %161 = vmatprep.mubr.f32.mxu0 0.0
      %162 = vmatmul.mubr.f32.gmra.mxu0 %v90
      %v163 = vpop.f32.mrf.mxu0
      %v164 = vadd.f32 %v83, %v163
      %v165 = vpop.f32.mrf.mxu0
      %166 = vdwg.mxu0
      %v167 = vmul.f32 %v159, 0.5
      %v168 = vmul.f32 %v164, 0.5
      %v169 = vmul.f32 %v159, 0.70710677
      %v170 = vmul.f32 %v164, 0.70710677
      %v171 = verf.f32.pop %v169
      %v172 = verf.f32.pop %v170
      %v173 = vadd.f32 %v171, 1.0
      %v174 = vadd.f32 %v172, 1.0
      %v175 = vmul.f32 %v167, %v173
      %v176 = vmul.f32 %v168, %v174
      %v177 = vsel %vm85, %v175, 0.0
      %178 = vadd.xlane.f32.xlu0 %v177
      %v179 = vpop.xlane.xlu0 %178
      %v180 = vsel %vm85, %v176, 0.0
      %181 = vadd.xlane.f32.xlu0 %v180
      %v182 = vpop.xlane.xlu0 %181
      %v183 = vrcp.pop 32.0
      %v184 = vmul.f32 %v179, %v183
      %v185 = vmul.f32 %v182, %v183
      %v186 = vsub.f32 %v175, %v184
      %v187 = vsub.f32 %v176, %v185
      %v188 = vmul.f32 %v186, %v186
      %v189 = vmul.f32 %v187, %v187
      %v190 = vsel %vm85, %v188, 0.0
      %191 = vadd.xlane.f32.xlu0 %v190
      %v192 = vpop.xlane.xlu0 %191
      %v193 = vsel %vm85, %v189, 0.0
      %194 = vadd.xlane.f32.xlu0 %v193
      %v195 = vpop.xlane.xlu0 %194
      %v196 = vmul.f32 %v192, %v183
      %v197 = vmul.f32 %v195, %v183
      %v198 = vadd.f32 %v196, 1e-12
      %v199 = vadd.f32 %v197, 1e-12
      %v200 = vrsqrt.pop %v198
      %v201 = vrsqrt.pop %v199
      %v202 = vmul.f32 %v186, %v200
      %v203 = vmul.f32 %v187, %v201
      %v204 = vld [vmem:[%s3] sm:$0x1]
      %v206 = vlaneseq
      %v207 = vshrl.u32 %v206, 7
      %v208 = vsub.s32 0, %v207
      %v209 = vrot.slane %v204, %v208
      %v211 = vmul.f32 %v202, %v209
      %v212 = vmul.f32 %v203, %v209
      %v213 = vld [vmem:[%s4] sm:$0x1]
      %v215 = vlaneseq
      %v216 = vshrl.u32 %v215, 7
      %v217 = vsub.s32 0, %v216
      %v218 = vrot.slane %v213, %v217
      %v220 = vadd.f32 %v211, %v218
      %v221 = vadd.f32 %v212, %v218
      %222 = vst.msk [vmem:[#allocation2] sm:$0xff] %vm85, %v220
      %223 = vst.msk [vmem:[#allocation2 + $0x8] sm:$0xff] %vm85, %v221
    $region45: #{tpu_custom_call.1} parent=1 // pred_fallthru
      _
    %v224 = vld [vmem:[#allocation2] sm:$0xff]
    %v225 = vld [vmem:[#allocation2 + $0x8] sm:$0xff]
    %v226 = vld [vmem:[#allocation8] sm:$0xff]
    %v227 = vld [vmem:[#allocation8 + $0x8] sm:$0xff]
    %v228 = vld [vmem:[#allocation8 + $0x10] sm:$0xff]
    %v229 = vld [vmem:[#allocation8 + $0x18] sm:$0xff]
    %v230 = vld [vmem:[#allocation8 + $0x20] sm:$0xff]
    %v231 = vld [vmem:[#allocation8 + $0x28] sm:$0xff]
    %v232 = vld [vmem:[#allocation8 + $0x30] sm:$0xff]
    %v233 = vld [vmem:[#allocation8 + $0x38] sm:$0xff]
    %v234 = vld [vmem:[#allocation8 + $0x40] sm:$0xff]
    %v235 = vld [vmem:[#allocation8 + $0x48] sm:$0xff]
    %v236 = vld [vmem:[#allocation8 + $0x50] sm:$0xff]
    %v237 = vld [vmem:[#allocation8 + $0x58] sm:$0xff]
    %v238 = vld [vmem:[#allocation8 + $0x60] sm:$0xff]
    %v239 = vld [vmem:[#allocation8 + $0x68] sm:$0xff]
    %v240 = vld [vmem:[#allocation8 + $0x70] sm:$0xff]
    %v241 = vld [vmem:[#allocation8 + $0x78] sm:$0xff]
    %v242 = vld [vmem:[%s6] sm:$0xf]
    %v244 = vlaneseq
    %v245 = vshrl.u32 %v244, 7
    %v246 = vsub.s32 0, %v245
    %v247 = vrot.slane %v242, %v246
    %v248 = vlaneseq
    %v249 = vshrl.u32 %v248, 7
    %v250 = vsub.s32 1, %v249
    %v251 = vrot.slane %v242, %v250
    %v252 = vlaneseq
    %v253 = vshrl.u32 %v252, 7
    %v254 = vsub.s32 2, %v253
    %v255 = vrot.slane %v242, %v254
    %v256 = vlaneseq
    %v257 = vshrl.u32 %v256, 7
    %v258 = vsub.s32 3, %v257
    %v259 = vrot.slane %v242, %v258
    %vm264 = vcmask 261120
    %v266 = vsel %vm264, %v224, 0
    %v269 = vsel %vm264, %v225, 0
    %271 = vmatprep.subr.mxu0 0.0
    %272 = vmatpush1.msra.mxu0 0.0
    %273 = vmatprep.subr.mxu0 0.0
    %274 = vmatpush1.msra.mxu0 0.0
    %275 = vmatprep.subr.mxu0 0.0
    %276 = vmatpush1.msra.mxu0 0.0
    %277 = vmatprep.subr.mxu0 0.0
    %278 = vmatpush1.msra.mxu0 0.0
    %279 = vmatprep.subr.mxu0 0.0
    %280 = vmatpush1.msra.mxu0 0.0
    %281 = vmatprep.subr.mxu0 0.0
    %282 = vmatpush1.msra.mxu0 0.0
    %283 = vmatprep.subr.mxu0 0.0
    %284 = vmatpush1.msra.mxu0 0.0
    %285 = vmatprep.subr.mxu0 0.0
    %286 = vmatpush1.msra.mxu0 0.0
    %287 = vmatprep.subr.mxu0 0.0
    %288 = vmatpush1.msra.mxu0 0.0
    %289 = vmatprep.subr.mxu0 0.0
    %290 = vmatpush1.msra.mxu0 0.0
    %291 = vmatprep.subr.mxu0 0.0
    %292 = vmatpush1.msra.mxu0 0.0
    %293 = vmatprep.subr.mxu0 0.0
    %294 = vmatpush1.msra.mxu0 0.0
    %295 = vmatprep.subr.mxu0 %v239
    %296 = vmatpush1.msra.mxu0 %v238
    %297 = vmatprep.subr.mxu0 %v235
    %298 = vmatpush1.msra.mxu0 %v234
    %299 = vmatprep.subr.mxu0 %v231
    %300 = vmatpush1.msra.mxu0 %v230
    %301 = vmatprep.subr.mxu0 %v227
    %302 = vmatpush1.msra.mxu0 %v226
    %303 = vmatprep.subr.mxu0 0.0
    %304 = vmatpush2.msra.mxu0 0.0
    %305 = vmatprep.subr.mxu0 0.0
    %306 = vmatpush2.msra.mxu0 0.0
    %307 = vmatprep.subr.mxu0 0.0
    %308 = vmatpush2.msra.mxu0 0.0
    %309 = vmatprep.subr.mxu0 0.0
    %310 = vmatpush2.msra.mxu0 0.0
    %311 = vmatprep.subr.mxu0 0.0
    %312 = vmatpush2.msra.mxu0 0.0
    %313 = vmatprep.subr.mxu0 0.0
    %314 = vmatpush2.msra.mxu0 0.0
    %315 = vmatprep.subr.mxu0 0.0
    %316 = vmatpush2.msra.mxu0 0.0
    %317 = vmatprep.subr.mxu0 0.0
    %318 = vmatpush2.msra.mxu0 0.0
    %319 = vmatprep.subr.mxu0 0.0
    %320 = vmatpush2.msra.mxu0 0.0
    %321 = vmatprep.subr.mxu0 0.0
    %322 = vmatpush2.msra.mxu0 0.0
    %323 = vmatprep.subr.mxu0 0.0
    %324 = vmatpush2.msra.mxu0 0.0
    %325 = vmatprep.subr.mxu0 0.0
    %326 = vmatpush2.msra.mxu0 0.0
    %327 = vmatprep.subr.mxu0 0.0
    %328 = vmatpush2.msra.mxu0 0.0
    %329 = vmatprep.subr.mxu0 0.0
    %330 = vmatpush2.msra.mxu0 0.0
    %331 = vmatprep.subr.mxu0 0.0
    %332 = vmatpush2.msra.mxu0 0.0
    %333 = vmatprep.subr.mxu0 0.0
    %334 = vmatpush2.msra.mxu0 0.0
    %335 = vmatprep.mubr.f32.mxu0 0.0
    %336 = vmatmul.mubr.f32.gmra.mxu0 %v266
    %v337 = vpop.f32.mrf.mxu0
    %v338 = vadd.f32 %v247, %v337
    %v339 = vpop.f32.mrf.mxu0
    %v340 = vadd.f32 %v251, %v339
    %341 = vmatprep.mubr.f32.mxu0 0.0
    %342 = vmatmul.mubr.f32.gmra.mxu0 %v269
    %v343 = vpop.f32.mrf.mxu0
    %v344 = vadd.f32 %v247, %v343
    %v345 = vpop.f32.mrf.mxu0
    %v346 = vadd.f32 %v251, %v345
    %347 = vdwg.mxu0
    %348 = vmatprep.subr.mxu0 0.0
    %349 = vmatpush1.msra.mxu0 0.0
    %350 = vmatprep.subr.mxu0 0.0
    %351 = vmatpush1.msra.mxu0 0.0
    %352 = vmatprep.subr.mxu0 0.0
    %353 = vmatpush1.msra.mxu0 0.0
    %354 = vmatprep.subr.mxu0 0.0
    %355 = vmatpush1.msra.mxu0 0.0
    %356 = vmatprep.subr.mxu0 0.0
    %357 = vmatpush1.msra.mxu0 0.0
    %358 = vmatprep.subr.mxu0 0.0
    %359 = vmatpush1.msra.mxu0 0.0
    %360 = vmatprep.subr.mxu0 0.0
    %361 = vmatpush1.msra.mxu0 0.0
    %362 = vmatprep.subr.mxu0 0.0
    %363 = vmatpush1.msra.mxu0 0.0
    %364 = vmatprep.subr.mxu0 0.0
    %365 = vmatpush1.msra.mxu0 0.0
    %366 = vmatprep.subr.mxu0 0.0
    %367 = vmatpush1.msra.mxu0 0.0
    %368 = vmatprep.subr.mxu0 0.0
    %369 = vmatpush1.msra.mxu0 0.0
    %370 = vmatprep.subr.mxu0 0.0
    %371 = vmatpush1.msra.mxu0 0.0
    %372 = vmatprep.subr.mxu0 %v241
    %373 = vmatpush1.msra.mxu0 %v240
    %374 = vmatprep.subr.mxu0 %v237
    %375 = vmatpush1.msra.mxu0 %v236
    %376 = vmatprep.subr.mxu0 %v233
    %377 = vmatpush1.msra.mxu0 %v232
    %378 = vmatprep.subr.mxu0 %v229
    %379 = vmatpush1.msra.mxu0 %v228
    %380 = vmatprep.subr.mxu0 0.0
    %381 = vmatpush2.msra.mxu0 0.0
    %382 = vmatprep.subr.mxu0 0.0
    %383 = vmatpush2.msra.mxu0 0.0
    %384 = vmatprep.subr.mxu0 0.0
    %385 = vmatpush2.msra.mxu0 0.0
    %386 = vmatprep.subr.mxu0 0.0
    %387 = vmatpush2.msra.mxu0 0.0
    %388 = vmatprep.subr.mxu0 0.0
    %389 = vmatpush2.msra.mxu0 0.0
    %390 = vmatprep.subr.mxu0 0.0
    %391 = vmatpush2.msra.mxu0 0.0
    %392 = vmatprep.subr.mxu0 0.0
    %393 = vmatpush2.msra.mxu0 0.0
    %394 = vmatprep.subr.mxu0 0.0
    %395 = vmatpush2.msra.mxu0 0.0
    %396 = vmatprep.subr.mxu0 0.0
    %397 = vmatpush2.msra.mxu0 0.0
    %398 = vmatprep.subr.mxu0 0.0
    %399 = vmatpush2.msra.mxu0 0.0
    %400 = vmatprep.subr.mxu0 0.0
    %401 = vmatpush2.msra.mxu0 0.0
    %402 = vmatprep.subr.mxu0 0.0
    %403 = vmatpush2.msra.mxu0 0.0
    %404 = vmatprep.subr.mxu0 0.0
    %405 = vmatpush2.msra.mxu0 0.0
    %406 = vmatprep.subr.mxu0 0.0
    %407 = vmatpush2.msra.mxu0 0.0
    %408 = vmatprep.subr.mxu0 0.0
    %409 = vmatpush2.msra.mxu0 0.0
    %410 = vmatprep.subr.mxu0 0.0
    %411 = vmatpush2.msra.mxu0 0.0
    %412 = vmatprep.mubr.f32.mxu0 0.0
    %413 = vmatmul.mubr.f32.gmra.mxu0 %v266
    %v414 = vpop.f32.mrf.mxu0
    %v415 = vadd.f32 %v255, %v414
    %v416 = vpop.f32.mrf.mxu0
    %v417 = vadd.f32 %v259, %v416
    %418 = vmatprep.mubr.f32.mxu0 0.0
    %419 = vmatmul.mubr.f32.gmra.mxu0 %v269
    %v420 = vpop.f32.mrf.mxu0
    %v421 = vadd.f32 %v255, %v420
    %v422 = vpop.f32.mrf.mxu0
    %v423 = vadd.f32 %v259, %v422
    %424 = vdwg.mxu0
    %425 = vst [vmem:[#allocation9] sm:$0xff] %v338
    %426 = vst [vmem:[#allocation9 + $0x8] sm:$0xff] %v340
    %427 = vst [vmem:[#allocation9 + $0x10] sm:$0xff] %v415
    %428 = vst [vmem:[#allocation9 + $0x18] sm:$0xff] %v417
    %429 = vst [vmem:[#allocation9 + $0x20] sm:$0xff] %v344
    %430 = vst [vmem:[#allocation9 + $0x28] sm:$0xff] %v346
    %431 = vst [vmem:[#allocation9 + $0x30] sm:$0xff] %v421
    %432 = vst [vmem:[#allocation9 + $0x38] sm:$0xff] %v423
    // Predicated region
    $region46: #{tpu_custom_call.1} parent=1 // pred_check
      _
    $region47: #{tpu_custom_call.1} parent=1 // pred_check_branch
      %434 = sbr.rel (0) target = $region49
    $region48: #{tpu_custom_call.1} parent=1 // pred_region
      %s436 = ssub.s32 1024, 1024
      %437 = vsyncadd [#allocation5], %s436
      %s438 = sshll.u32 [#allocation9], 4
      %s439 = int_to_ptr.vmem [resolvable:$true] %s438
      %444 = dma.vmem_to_hbm [thread:$0]  %s439, 1024, %s7, [#allocation5], 512, 512, 32
    $region49: #{tpu_custom_call.1} parent=1 // pred_fallthru
      _
    // Predicated region
    $region50: #{tpu_custom_call.1} parent=1 // pred_check
      _
    $region51: #{tpu_custom_call.1} parent=1 // pred_check_branch
      %446 = sbr.rel (0) target = $region53
    $region52: #{tpu_custom_call.1} parent=1 // pred_region
      %447 = dma.done [#allocation5], 1024
    $region53: #{tpu_custom_call.1} parent=1 // pred_fallthru
      _
    %448 = vsyncpa [#allocation4], 1
    %449 = vsyncpa [#allocation7], 1
    %450 = vsyncpa [#allocation5], 1

</llo_original>
